<compile_context>
chip_gen: v5e
topology: v5e:2x2
jax: 0.10.0
libtpu: 0.0.40
codegen_flags: <defaults>
</compile_context>

<pallas_src>
import numpy as np
import jax
import jax.numpy as jnp
from jax.experimental import pallas as pl
from jax.experimental.pallas import tpu as pltpu


def rainfall_to_pixel(rainfall_intensity, a=58.53, b=1.56):
    dBR = np.log10(rainfall_intensity) * 10.0
    dBZ = dBR * b + 10.0 * np.log10(a)
    pixel_vals = (dBZ + 10.0) / 70.0
    return pixel_vals


def _pick_sub_chunk(n_sub, per_row_bytes, budget_bytes):
    """Largest sublane chunk (multiple of 8 dividing n_sub, or n_sub itself) whose
    combined x+target+mask block fits the per-step byte budget."""
    cands = {n_sub}
    d = 8
    while d < n_sub:
        if n_sub % d == 0:
            cands.add(d)
        d += 8
    fitting = [c for c in sorted(cands) if c * per_row_bytes <= budget_bytes]
    # TODO(synk): for n_sub with awkward factors, a pl.cdiv grid + in-kernel sublane
    # masking of the ragged last chunk would keep the step near the byte budget;
    # divisor-only selection kept here (HKO 480x480 -> n_sub=1800 has good divisors).
    return fitting[-1] if fitting else min(cands)


def make_wce_kernel(thresholds_pix, class_weights, num_classes):
    thr = tuple(float(t) for t in thresholds_pix)
    cw = None if class_weights is None else tuple(float(w) for w in class_weights)
    C = num_classes

    def kernel(x_ref, t_ref, m_ref, o_ref):
        # x_ref: (1, B, C, sub, 128) bf16/f32; t_ref: (1, B, sub, 128) f32;
        # m_ref: (1, B, sub, 128) bf16/f32.  All arithmetic in f32.
        tgt = t_ref[0]                              # (B, sub, 128) f32
        msk = m_ref[0].astype(jnp.float32)          # (B, sub, 128)

        # pass 1: running max over the class axis (per-class upcast, no f32 x copy)
        mx = x_ref[0, :, 0].astype(jnp.float32)
        for c in range(1, C):
            mx = jnp.maximum(mx, x_ref[0, :, c].astype(jnp.float32))

        # pass 2: sum-exp fused with the class-index gather.
        # The torch loop sequentially overwrites class_index with
        #   class_index[target >= thr[i]] = i
        # (in list order) and then gathers logits[class_index] / weight[class_index].
        # Chaining the same conditions in the same order directly into the selects of
        # the picked logit / weight is the identical sequential overwrite; the i=0
        # iteration (thr[0] == 0.0) is a no-op because the initial pick is class 0.
        x0 = x_ref[0, :, 0].astype(jnp.float32)
        sumexp = jnp.exp(x0 - mx)
        picked_x = x0
        if cw is not None:
            picked_w = jnp.full(tgt.shape, jnp.float32(cw[0]), jnp.float32)
        for c in range(1, C):
            xc = x_ref[0, :, c].astype(jnp.float32)
            sumexp = sumexp + jnp.exp(xc - mx)
            sel = tgt >= jnp.float32(thr[c])
            picked_x = jnp.where(sel, xc, picked_x)
            if cw is not None:
                picked_w = jnp.where(sel, jnp.float32(cw[c]), picked_w)

        # err = -log_softmax(x)[cls]  (cross_entropy, reduction='none')
        err = (mx + jnp.log(sumexp)) - picked_x
        if cw is not None:
            err = err * picked_w
        err = err * msk
        # NOTE: the per-time-step weight (1 + s*LAMBDA) is constant over a grid step
        # and is applied to the partials in the wrapper, not per pixel.

        partial = jnp.sum(err, axis=0)                           # (sub, 128)
        o_ref[0, 0] = jnp.sum(partial, axis=0, keepdims=True)    # (1, 128)

    return kernel


class WeightedCrossEntropyLoss:
    """JAX/Pallas equivalent of the PyTorch WeightedCrossEntropyLoss module."""

    def __init__(self, thresholds, weight=None, LAMBDA=None, out_len=None,
                 logits_dtype=jnp.bfloat16, mask_dtype=jnp.bfloat16,
                 step_budget_bytes=8 * 1024 * 1024,
                 vmem_limit_bytes=48 * 1024 * 1024):
        self._thresholds = np.asarray(thresholds, dtype=np.float32)
        # HKO thresholds are strictly ascending; the fused select-gather mirrors the
        # torch sequential-overwrite order regardless, but keep the intent explicit.
        assert np.all(np.diff(self._thresholds) > 0), "thresholds must be ascending"
        self._weight = None if weight is None else np.asarray(weight, dtype=np.float32)
        self._lambda = LAMBDA
        self._out_len = out_len            # cfg.HKO.BENCHMARK.OUT_LEN
        self._logits_dtype = jnp.dtype(logits_dtype)
        self._mask_dtype = jnp.dtype(mask_dtype)
        self._step_budget_bytes = step_budget_bytes
        self._vmem_limit_bytes = vmem_limit_bytes

    def __call__(self, input, target, mask):
        S, B, C, H, W = input.shape
        if self._out_len is not None:
            assert S == self._out_len

        thr_pix = [0.0] + rainfall_to_pixel(self._thresholds).tolist()
        # class indices must be valid logit indices (torch's cross_entropy would fail too)
        assert C == len(thr_pix), (C, len(thr_pix))

        HW = H * W
        n_total = S * B * HW  # mean denominator of the original module

        # Narrow HBM traffic: logits/mask streamed at reduced precision (target stays
        # f32 so threshold comparisons are exact; mask 0/1 is exact in bf16). In a real
        # pipeline the producer should emit bf16 directly so this cast fuses upstream.
        xf = input.reshape(S, B, C, HW).astype(self._logits_dtype)
        tf = target.reshape(S, B, HW).astype(jnp.float32)
        mf = mask.reshape(S, B, HW).astype(self._mask_dtype)

        pad = (-HW) % 128
        if pad:
            # TODO(synk): for HW % 128 != 0 this pad materializes an extra HBM
            # round-trip; an in-kernel iota lane mask on the tail would avoid it
            # (moot for HKO 480x480 and the 16x16 demo, both multiples of 128).
            xf = jnp.pad(xf, ((0, 0), (0, 0), (0, 0), (0, pad)))
            tf = jnp.pad(tf, ((0, 0), (0, 0), (0, pad)))
            mf = jnp.pad(mf, ((0, 0), (0, 0), (0, pad)))
        HWp = HW + pad
        n_sub = HWp // 128

        # lane-dense layout: (..., n_sub, 128) -> sublanes x lanes
        x5 = xf.reshape(S, B, C, n_sub, 128)
        t4 = tf.reshape(S, B, n_sub, 128)
        m4 = mf.reshape(S, B, n_sub, 128)

        per_row = B * 128 * (C * x5.dtype.itemsize
                             + t4.dtype.itemsize + m4.dtype.itemsize)
        sub_chunk = _pick_sub_chunk(n_sub, per_row, self._step_budget_bytes)
        n_chunks = n_sub // sub_chunk

        kernel = make_wce_kernel(thr_pix, self._weight, C)

        partials = pl.pallas_call(
            kernel,
            out_shape=jax.ShapeDtypeStruct((S, n_chunks, 1, 128), jnp.float32),
            grid=(S, n_chunks),
            in_specs=[
                pl.BlockSpec((1, B, C, sub_chunk, 128), lambda s, h: (s, 0, 0, h, 0)),
                pl.BlockSpec((1, B, sub_chunk, 128), lambda s, h: (s, 0, h, 0)),
                pl.BlockSpec((1, B, sub_chunk, 128), lambda s, h: (s, 0, h, 0)),
            ],
            out_specs=pl.BlockSpec((1, 1, 1, 128), lambda s, h: (s, h, 0, 0)),
            compiler_params=pltpu.CompilerParams(
                dimension_semantics=("parallel", "parallel"),
                vmem_limit_bytes=self._vmem_limit_bytes),
        )(x5, t4, m4)

        # per-time-step weight (1 + s*LAMBDA), hoisted out of the per-pixel path
        if self._lambda is not None:
            tw = 1.0 + self._lambda * jnp.arange(S, dtype=jnp.float32)
            partials = partials * tw[:, None, None, None]
        return jnp.sum(partials) / jnp.float32(n_total)


def reference_loss(x, t, m, thresholds, weight, lam):
    """Pure-JAX reference mirroring the PyTorch forward (f32 math)."""
    S, B, C, H, W = x.shape
    thr = [0.0] + rainfall_to_pixel(np.asarray(thresholds, np.float32)).tolist()
    tgt = t[:, :, 0]                                          # (S,B,H,W)
    cls = jnp.zeros(tgt.shape, jnp.int32)
    for i, th in enumerate(thr):
        cls = jnp.where(tgt >= th, jnp.int32(i), cls)
    logp = jax.nn.log_softmax(x, axis=2)                      # (S,B,C,H,W)
    picked = jnp.take_along_axis(logp, cls[:, :, None], axis=2)[:, :, 0]
    if weight is not None:
        w = jnp.asarray(weight, jnp.float32)[cls]
    else:
        w = jnp.float32(1.0)
    err = -picked * w
    if lam is not None:
        tw = 1.0 + lam * jnp.arange(S, dtype=jnp.float32)
        err = err * tw[:, None, None, None]
    err = err * m[:, :, 0]
    return jnp.mean(err)


if __name__ == "__main__":
    # small shapes consistent with the module: OUT_LEN=8, batch=2, 6 rainfall classes, 16x16
    S, B, C, H, W = 8, 2, 6, 16, 16
    thresholds = np.array([0.5, 2.0, 5.0, 10.0, 30.0], dtype=np.float32)        # HKO thresholds
    class_weight = np.array([1.0, 1.0, 2.0, 5.0, 10.0, 30.0], dtype=np.float32)  # deterministic init
    LAMBDA = 0.01

    key = jax.random.PRNGKey(0)
    k1, k2, k3 = jax.random.split(key, 3)
    x = jax.random.normal(k1, (S, B, C, H, W), dtype=jnp.float32)
    target = jax.random.uniform(k2, (S, B, 1, H, W), dtype=jnp.float32)
    mask = (jax.random.uniform(k3, (S, B, 1, H, W)) > 0.2).astype(jnp.float32)

    loss_mod = WeightedCrossEntropyLoss(thresholds, weight=class_weight,
                                        LAMBDA=LAMBDA, out_len=S)
    loss = loss_mod(x, target, mask)
    loss = jax.block_until_ready(loss)

    # reference on the same bf16-rounded logits the kernel streams (kernel math is f32)
    x_q = x.astype(jnp.bfloat16).astype(jnp.float32)
    ref = reference_loss(x_q, target, mask, thresholds, class_weight, LAMBDA)
    ref = jax.block_until_ready(ref)
    assert np.allclose(np.asarray(loss), np.asarray(ref), rtol=1e-4, atol=1e-5), (loss, ref)

    # sanity check against the full-f32 reference (bf16 input quantization only)
    ref_f32 = jax.block_until_ready(
        reference_loss(x, target, mask, thresholds, class_weight, LAMBDA))
    assert np.allclose(np.asarray(loss), np.asarray(ref_f32), rtol=2e-2, atol=2e-2), (loss, ref_f32)

    print("KERNEL_OK")
</pallas_src>

<mosaic_0001>
module attributes {stable_mosaic.version = 11 : i64} {
  func.func @kernel(%arg0: i32, %arg1: i32, %arg2: memref<1x2x6x2x128xbf16, #tpu.memory_space<vmem>>, %arg3: memref<1x2x2x128xf32, #tpu.memory_space<vmem>>, %arg4: memref<1x2x2x128xbf16, #tpu.memory_space<vmem>>, %arg5: memref<1x1x1x128xf32, #tpu.memory_space<vmem>>) attributes {dimension_semantics = [#tpu.dimension_semantics<parallel>, #tpu.dimension_semantics<parallel>], iteration_bounds = array<i64: 8, 1>, scalar_prefetch = 0 : i64, scratch_operands = 0 : i64, tpu.core_type = #tpu.core_type<tc>, window_params = [{transform_indices = @transform_0, window_bounds = array<i64: 1, 2, 6, 2, 128>}, {transform_indices = @transform_1, window_bounds = array<i64: 1, 2, 2, 128>}, {transform_indices = @transform_2, window_bounds = array<i64: 1, 2, 2, 128>}, {transform_indices = @transform_3, window_bounds = array<i64: 1, 1, 1, 128>}]} {
    %c0 = arith.constant 0 : index
    %c0_0 = arith.constant 0 : index
    %c0_1 = arith.constant 0 : index
    %c0_2 = arith.constant 0 : index
    %0 = vector.load %arg3[%c0, %c0_0, %c0_1, %c0_2] : memref<1x2x2x128xf32, #tpu.memory_space<vmem>>, vector<1x2x2x128xf32>
    %1 = vector.shape_cast %0 : vector<1x2x2x128xf32> to vector<2x2x128xf32>
    %c0_3 = arith.constant 0 : index
    %c0_4 = arith.constant 0 : index
    %c0_5 = arith.constant 0 : index
    %c0_6 = arith.constant 0 : index
    %2 = vector.load %arg4[%c0_3, %c0_4, %c0_5, %c0_6] : memref<1x2x2x128xbf16, #tpu.memory_space<vmem>>, vector<1x2x2x128xbf16>
    %3 = vector.shape_cast %2 : vector<1x2x2x128xbf16> to vector<2x2x128xbf16>
    %4 = arith.extf %3 : vector<2x2x128xbf16> to vector<2x2x128xf32>
    %c0_7 = arith.constant 0 : index
    %c0_8 = arith.constant 0 : index
    %c0_9 = arith.constant 0 : index
    %c0_10 = arith.constant 0 : index
    %c0_11 = arith.constant 0 : index
    %5 = vector.load %arg2[%c0_7, %c0_8, %c0_9, %c0_10, %c0_11] : memref<1x2x6x2x128xbf16, #tpu.memory_space<vmem>>, vector<1x2x1x2x128xbf16>
    %6 = vector.shape_cast %5 : vector<1x2x1x2x128xbf16> to vector<2x2x128xbf16>
    %7 = arith.extf %6 : vector<2x2x128xbf16> to vector<2x2x128xf32>
    %c0_12 = arith.constant 0 : index
    %c0_13 = arith.constant 0 : index
    %c1 = arith.constant 1 : index
    %c0_14 = arith.constant 0 : index
    %c0_15 = arith.constant 0 : index
    %8 = vector.load %arg2[%c0_12, %c0_13, %c1, %c0_14, %c0_15] : memref<1x2x6x2x128xbf16, #tpu.memory_space<vmem>>, vector<1x2x1x2x128xbf16>
    %9 = vector.shape_cast %8 : vector<1x2x1x2x128xbf16> to vector<2x2x128xbf16>
    %10 = arith.extf %9 : vector<2x2x128xbf16> to vector<2x2x128xf32>
    %11 = arith.maximumf %7, %10 : vector<2x2x128xf32>
    %c0_16 = arith.constant 0 : index
    %c0_17 = arith.constant 0 : index
    %c2 = arith.constant 2 : index
    %c0_18 = arith.constant 0 : index
    %c0_19 = arith.constant 0 : index
    %12 = vector.load %arg2[%c0_16, %c0_17, %c2, %c0_18, %c0_19] : memref<1x2x6x2x128xbf16, #tpu.memory_space<vmem>>, vector<1x2x1x2x128xbf16>
    %13 = vector.shape_cast %12 : vector<1x2x1x2x128xbf16> to vector<2x2x128xbf16>
    %14 = arith.extf %13 : vector<2x2x128xbf16> to vector<2x2x128xf32>
    %15 = arith.maximumf %11, %14 : vector<2x2x128xf32>
    %c0_20 = arith.constant 0 : index
    %c0_21 = arith.constant 0 : index
    %c3 = arith.constant 3 : index
    %c0_22 = arith.constant 0 : index
    %c0_23 = arith.constant 0 : index
    %16 = vector.load %arg2[%c0_20, %c0_21, %c3, %c0_22, %c0_23] : memref<1x2x6x2x128xbf16, #tpu.memory_space<vmem>>, vector<1x2x1x2x128xbf16>
    %17 = vector.shape_cast %16 : vector<1x2x1x2x128xbf16> to vector<2x2x128xbf16>
    %18 = arith.extf %17 : vector<2x2x128xbf16> to vector<2x2x128xf32>
    %19 = arith.maximumf %15, %18 : vector<2x2x128xf32>
    %c0_24 = arith.constant 0 : index
    %c0_25 = arith.constant 0 : index
    %c4 = arith.constant 4 : index
    %c0_26 = arith.constant 0 : index
    %c0_27 = arith.constant 0 : index
    %20 = vector.load %arg2[%c0_24, %c0_25, %c4, %c0_26, %c0_27] : memref<1x2x6x2x128xbf16, #tpu.memory_space<vmem>>, vector<1x2x1x2x128xbf16>
    %21 = vector.shape_cast %20 : vector<1x2x1x2x128xbf16> to vector<2x2x128xbf16>
    %22 = arith.extf %21 : vector<2x2x128xbf16> to vector<2x2x128xf32>
    %23 = arith.maximumf %19, %22 : vector<2x2x128xf32>
    %c0_28 = arith.constant 0 : index
    %c0_29 = arith.constant 0 : index
    %c5 = arith.constant 5 : index
    %c0_30 = arith.constant 0 : index
    %c0_31 = arith.constant 0 : index
    %24 = vector.load %arg2[%c0_28, %c0_29, %c5, %c0_30, %c0_31] : memref<1x2x6x2x128xbf16, #tpu.memory_space<vmem>>, vector<1x2x1x2x128xbf16>
    %25 = vector.shape_cast %24 : vector<1x2x1x2x128xbf16> to vector<2x2x128xbf16>
    %26 = arith.extf %25 : vector<2x2x128xbf16> to vector<2x2x128xf32>
    %27 = arith.maximumf %23, %26 : vector<2x2x128xf32>
    %c0_32 = arith.constant 0 : index
    %c0_33 = arith.constant 0 : index
    %c0_34 = arith.constant 0 : index
    %c0_35 = arith.constant 0 : index
    %c0_36 = arith.constant 0 : index
    %28 = vector.load %arg2[%c0_32, %c0_33, %c0_34, %c0_35, %c0_36] : memref<1x2x6x2x128xbf16, #tpu.memory_space<vmem>>, vector<1x2x1x2x128xbf16>
    %29 = vector.shape_cast %28 : vector<1x2x1x2x128xbf16> to vector<2x2x128xbf16>
    %30 = arith.extf %29 : vector<2x2x128xbf16> to vector<2x2x128xf32>
    %31 = arith.subf %30, %27 : vector<2x2x128xf32>
    %32 = math.exp %31 : vector<2x2x128xf32>
    %cst = arith.constant 1.000000e+00 : f32
    %33 = vector.broadcast %cst : f32 to vector<2x2x128xf32>
    %c0_37 = arith.constant 0 : index
    %c0_38 = arith.constant 0 : index
    %c1_39 = arith.constant 1 : index
    %c0_40 = arith.constant 0 : index
    %c0_41 = arith.constant 0 : index
    %34 = vector.load %arg2[%c0_37, %c0_38, %c1_39, %c0_40, %c0_41] : memref<1x2x6x2x128xbf16, #tpu.memory_space<vmem>>, vector<1x2x1x2x128xbf16>
    %35 = vector.shape_cast %34 : vector<1x2x1x2x128xbf16> to vector<2x2x128xbf16>
    %36 = arith.extf %35 : vector<2x2x128xbf16> to vector<2x2x128xf32>
    %37 = arith.subf %36, %27 : vector<2x2x128xf32>
    %38 = math.exp %37 : vector<2x2x128xf32>
    %39 = arith.addf %32, %38 : vector<2x2x128xf32>
    %cst_42 = arith.constant 0.32825309 : f32
    %40 = vector.broadcast %cst_42 : f32 to vector<2x2x128xf32>
    %41 = arith.cmpf oge, %1, %40 : vector<2x2x128xf32>
    %42 = arith.select %41, %36, %30 : vector<2x2x128xi1>, vector<2x2x128xf32>
    %cst_43 = arith.constant 1.000000e+00 : f32
    %43 = vector.broadcast %cst_43 : f32 to vector<2x2x128xf32>
    %44 = arith.select %41, %43, %33 : vector<2x2x128xi1>, vector<2x2x128xf32>
    %c0_44 = arith.constant 0 : index
    %c0_45 = arith.constant 0 : index
    %c2_46 = arith.constant 2 : index
    %c0_47 = arith.constant 0 : index
    %c0_48 = arith.constant 0 : index
    %45 = vector.load %arg2[%c0_44, %c0_45, %c2_46, %c0_47, %c0_48] : memref<1x2x6x2x128xbf16, #tpu.memory_space<vmem>>, vector<1x2x1x2x128xbf16>
    %46 = vector.shape_cast %45 : vector<1x2x1x2x128xbf16> to vector<2x2x128xbf16>
    %47 = arith.extf %46 : vector<2x2x128xbf16> to vector<2x2x128xf32>
    %48 = arith.subf %47, %27 : vector<2x2x128xf32>
    %49 = math.exp %48 : vector<2x2x128xf32>
    %50 = arith.addf %39, %49 : vector<2x2x128xf32>
    %cst_49 = arith.constant 0.462426484 : f32
    %51 = vector.broadcast %cst_49 : f32 to vector<2x2x128xf32>
    %52 = arith.cmpf oge, %1, %51 : vector<2x2x128xf32>
    %53 = arith.select %52, %47, %42 : vector<2x2x128xi1>, vector<2x2x128xf32>
    %cst_50 = arith.constant 2.000000e+00 : f32
    %54 = vector.broadcast %cst_50 : f32 to vector<2x2x128xf32>
    %55 = arith.select %52, %54, %44 : vector<2x2x128xi1>, vector<2x2x128xf32>
    %c0_51 = arith.constant 0 : index
    %c0_52 = arith.constant 0 : index
    %c3_53 = arith.constant 3 : index
    %c0_54 = arith.constant 0 : index
    %c0_55 = arith.constant 0 : index
    %56 = vector.load %arg2[%c0_51, %c0_52, %c3_53, %c0_54, %c0_55] : memref<1x2x6x2x128xbf16, #tpu.memory_space<vmem>>, vector<1x2x1x2x128xbf16>
    %57 = vector.shape_cast %56 : vector<1x2x1x2x128xbf16> to vector<2x2x128xbf16>
    %58 = arith.extf %57 : vector<2x2x128xbf16> to vector<2x2x128xf32>
    %59 = arith.subf %58, %27 : vector<2x2x128xf32>
    %60 = math.exp %59 : vector<2x2x128xf32>
    %61 = arith.addf %50, %60 : vector<2x2x128xf32>
    %cst_56 = arith.constant 0.551110268 : f32
    %62 = vector.broadcast %cst_56 : f32 to vector<2x2x128xf32>
    %63 = arith.cmpf oge, %1, %62 : vector<2x2x128xf32>
    %64 = arith.select %63, %58, %53 : vector<2x2x128xi1>, vector<2x2x128xf32>
    %cst_57 = arith.constant 5.000000e+00 : f32
    %65 = vector.broadcast %cst_57 : f32 to vector<2x2x128xf32>
    %66 = arith.select %63, %65, %55 : vector<2x2x128xi1>, vector<2x2x128xf32>
    %c0_58 = arith.constant 0 : index
    %c0_59 = arith.constant 0 : index
    %c4_60 = arith.constant 4 : index
    %c0_61 = arith.constant 0 : index
    %c0_62 = arith.constant 0 : index
    %67 = vector.load %arg2[%c0_58, %c0_59, %c4_60, %c0_61, %c0_62] : memref<1x2x6x2x128xbf16, #tpu.memory_space<vmem>>, vector<1x2x1x2x128xbf16>
    %68 = vector.shape_cast %67 : vector<1x2x1x2x128xbf16> to vector<2x2x128xbf16>
    %69 = arith.extf %68 : vector<2x2x128xbf16> to vector<2x2x128xf32>
    %70 = arith.subf %69, %27 : vector<2x2x128xf32>
    %71 = math.exp %70 : vector<2x2x128xf32>
    %72 = arith.addf %61, %71 : vector<2x2x128xf32>
    %cst_63 = arith.constant 0.618196904 : f32
    %73 = vector.broadcast %cst_63 : f32 to vector<2x2x128xf32>
    %74 = arith.cmpf oge, %1, %73 : vector<2x2x128xf32>
    %75 = arith.select %74, %69, %64 : vector<2x2x128xi1>, vector<2x2x128xf32>
    %cst_64 = arith.constant 1.000000e+01 : f32
    %76 = vector.broadcast %cst_64 : f32 to vector<2x2x128xf32>
    %77 = arith.select %74, %76, %66 : vector<2x2x128xi1>, vector<2x2x128xf32>
    %c0_65 = arith.constant 0 : index
    %c0_66 = arith.constant 0 : index
    %c5_67 = arith.constant 5 : index
    %c0_68 = arith.constant 0 : index
    %c0_69 = arith.constant 0 : index
    %78 = vector.load %arg2[%c0_65, %c0_66, %c5_67, %c0_68, %c0_69] : memref<1x2x6x2x128xbf16, #tpu.memory_space<vmem>>, vector<1x2x1x2x128xbf16>
    %79 = vector.shape_cast %78 : vector<1x2x1x2x128xbf16> to vector<2x2x128xbf16>
    %80 = arith.extf %79 : vector<2x2x128xbf16> to vector<2x2x128xf32>
    %81 = arith.subf %80, %27 : vector<2x2x128xf32>
    %82 = math.exp %81 : vector<2x2x128xf32>
    %83 = arith.addf %72, %82 : vector<2x2x128xf32>
    %cst_70 = arith.constant 0.724526822 : f32
    %84 = vector.broadcast %cst_70 : f32 to vector<2x2x128xf32>
    %85 = arith.cmpf oge, %1, %84 : vector<2x2x128xf32>
    %86 = arith.select %85, %80, %75 : vector<2x2x128xi1>, vector<2x2x128xf32>
    %cst_71 = arith.constant 3.000000e+01 : f32
    %87 = vector.broadcast %cst_71 : f32 to vector<2x2x128xf32>
    %88 = arith.select %85, %87, %77 : vector<2x2x128xi1>, vector<2x2x128xf32>
    %89 = math.log %83 : vector<2x2x128xf32>
    %90 = arith.addf %27, %89 : vector<2x2x128xf32>
    %91 = arith.subf %90, %86 : vector<2x2x128xf32>
    %92 = arith.mulf %91, %88 : vector<2x2x128xf32>
    %93 = arith.mulf %92, %4 : vector<2x2x128xf32>
    %cst_72 = arith.constant dense<0.000000e+00> : vector<2x128xf32>
    %94 = vector.multi_reduction <add>, %93, %cst_72 [0] : vector<2x2x128xf32> to vector<2x128xf32>
    %cst_73 = arith.constant dense<0.000000e+00> : vector<128xf32>
    %95 = vector.multi_reduction <add>, %94, %cst_73 [0] : vector<2x128xf32> to vector<128xf32>
    %96 = vector.shape_cast %95 : vector<128xf32> to vector<1x128xf32>
    %c0_74 = arith.constant 0 : index
    %c0_75 = arith.constant 0 : index
    %c0_76 = arith.constant 0 : index
    %c0_77 = arith.constant 0 : index
    %97 = vector.load %arg5[%c0_74, %c0_75, %c0_76, %c0_77] : memref<1x1x1x128xf32, #tpu.memory_space<vmem>>, vector<1x1x1x128xf32>
    %98 = vector.shape_cast %97 : vector<1x1x1x128xf32> to vector<1x128xf32>
    %99 = vector.shape_cast %96 : vector<1x128xf32> to vector<1x1x1x128xf32>
    tpu.vector_store %arg5[%c0_74, %c0_75, %c0_76, %c0_77], %99 {strides = array<i32>} : memref<1x1x1x128xf32, #tpu.memory_space<vmem>>, vector<1x1x1x128xf32>,
    return
  }
  func.func @transform_0(%arg0: i32, %arg1: i32) -> (i32, i32, i32, i32, i32) {
    %c0_i32 = arith.constant 0 : i32
    %c0_i32_0 = arith.constant 0 : i32
    %c0_i32_1 = arith.constant 0 : i32
    %c0_i32_2 = arith.constant 0 : i32
    return %arg0, %c0_i32, %c0_i32_0, %arg1, %c0_i32_1 : i32, i32, i32, i32, i32
  }
  func.func @transform_1(%arg0: i32, %arg1: i32) -> (i32, i32, i32, i32) {
    %c0_i32 = arith.constant 0 : i32
    %c0_i32_0 = arith.constant 0 : i32
    %c0_i32_1 = arith.constant 0 : i32
    return %arg0, %c0_i32, %arg1, %c0_i32_0 : i32, i32, i32, i32
  }
  func.func @transform_2(%arg0: i32, %arg1: i32) -> (i32, i32, i32, i32) {
    %c0_i32 = arith.constant 0 : i32
    %c0_i32_0 = arith.constant 0 : i32
    %c0_i32_1 = arith.constant 0 : i32
    return %arg0, %c0_i32, %arg1, %c0_i32_0 : i32, i32, i32, i32
  }
  func.func @transform_3(%arg0: i32, %arg1: i32) -> (i32, i32, i32, i32) {
    %c0_i32 = arith.constant 0 : i32
    %c0_i32_0 = arith.constant 0 : i32
    %c0_i32_1 = arith.constant 0 : i32
    return %arg0, %arg1, %c0_i32, %c0_i32_0 : i32, i32, i32, i32
  }
}

</mosaic_0001>

<llo_original>
// kernel: tpu_custom_call.1
$region0: #{tpu_custom_call.1}
  #allocation0 [shape = 'u32[]', space=smem, size = 0x4, offset = 0x4, fixed_abs, tag = 'smem constant byte address 0x4 - core index']
  #allocation1 [shape = 'u32[72,128]{1,0:T(1,128)}', space=vmem, size = 0x9000, scoped, tag = 'internal scratch']
  %s0 = inlined_call_operand.hbm [shape: bf16[8,2,6,2,128], index: 0, kind: input, shape index: {}]
  %s1 = inlined_call_operand.hbm [shape: f32[8,2,2,128], index: 1, kind: input, shape index: {}]
  %s2 = inlined_call_operand.hbm [shape: bf16[8,2,2,128], index: 2, kind: input, shape index: {}]
  %s3 = inlined_call_operand.hbm [shape: f32[8,1,1,128], index: 3, kind: output, shape index: {}]
  %s4 = sld [smem:[#allocation0]]
  $region57: #{tpu_custom_call.1} parent=0
    _
  %s6 = ssub.s32 1, %s4
  %s7 = scalar_select 0, %s6, %s4
  $region1: #{tpu_custom_call.1} parent=0
    #allocation2 [shape = 'u8[12288]{0}', space=vmem, size = 0x3000, scoped, tag = 'input window, operand 0']
    #allocation3 [shape = 's32[2]{0}', space=sflag, size = 0x8, scoped, tag = 'scoped memory for tpu_custom_call.1']
    #allocation4 [shape = 's32[2]{0}', space=sflag, size = 0x8, scoped, tag = 'scoped memory for tpu_custom_call.1']
    #allocation5 [shape = 'u8[4096]{0}', space=vmem, size = 0x1000, scoped, tag = 'input window, operand 1']
    #allocation6 [shape = 's32[2]{0}', space=sflag, size = 0x8, scoped, tag = 'scoped memory for tpu_custom_call.1']
    #allocation7 [shape = 'u8[2048]{0}', space=vmem, size = 0x800, scoped, tag = 'input window, operand 2']
    #allocation8 [shape = 'u8[1024]{0}', space=vmem, size = 0x400, scoped, tag = 'output window, operand 0']
    %8 = vsyncpa [#allocation3], 0
    %s9 = scalar_lea.sflag [#allocation3], 1
    %10 = vsyncpa %s9, 0
    %11 = vsyncpa [#allocation6], 0
    %s12 = scalar_lea.sflag [#allocation6], 1
    %13 = vsyncpa %s12, 0
    %14 = vsyncpa [#allocation4], 0
    %s15 = scalar_lea.sflag [#allocation4], 1
    %16 = vsyncpa %s15, 0
    loop: start=0, step=1, limit=10
    $region2: #{tpu_custom_call.1} parent=1 // loop_pre_header
      _
    $region3: #{tpu_custom_call.1} parent=1 // loop_header
      %s18 = sphi 0, %s22
      %p19 = scmp.ge.s32.totalorder %s18, 10
      %s25 = sphi 0, %s37
      %s26 = sphi 0, %s33
      %s27 = sphi 0, %s25
      %s28 = sphi 0, %s26
      %s29 = sphi 0, %s27
      %s30 = sphi 0, %s28
      %s42 = sphi 0, %s44
      %s45 = sphi 0, %s42
      %s46 = sphi 0, %s45
      %s62 = sphi 0, %s46
      %s70 = sphi 0, %s72
      %s73 = sphi 0, %s70
      %s74 = sphi 0, %s73
      %s90 = sphi 0, %s74
      %s98 = sphi 0, %s100
      %s101 = sphi 0, %s98
      %s102 = sphi 0, %s101
      %s118 = sphi 0, %s102
      %s126 = sphi 0, %s128
      %s129 = sphi 0, %s126
      %s130 = sphi 0, %s129
      %s146 = sphi 0, %s130
    $region4: #{tpu_custom_call.1} parent=1 // loop_header_branch
      %21 = sbr.rel (%p19) target = $region8
    $region5: #{tpu_custom_call.1} parent=1 // loop_body
      %s23 = ssub.s32 %s18, 1
      %s24 = ssub.s32 %s18, 2
      %s31 = sadd.s32 1, %s26
      %p32 = scmp.ge.s32.totalorder %s31, 1
      %s33 = scalar_select %p32, 0, %s31
      %s34 = sadd.s32 1, %s25
      %s35 = scalar_select %p32, %s34, %s25
      %p36 = scmp.ge.s32.totalorder %s35, 8
      %s37 = scalar_select %p36, 0, %s35
      %s38 = ssub.s32 %s25, %s37
      %s39 = ssub.s32 %s26, %s33
      %s40 = sor.u32 %s38, %s39
      %p41 = scmp.eq.s32.totalorder %s40, 0
      %s43 = sadd.s32 %s42, 1
      %s44 = scalar_select %p41, %s42, %s43
      %p47 = pneg %p41
      %p48 = scmp.eq.s32.totalorder %s18, 7
      %p49 = por %p47, %p48
      %p50 = scmp.ne.s32.totalorder %s42, %s45
      %p51 = scmp.eq.s32.totalorder %s18, 0
      %p52 = por %p50, %p51
      %p53 = scmp.ne.s32.totalorder %s42, %s45
      %p54 = scmp.eq.s32.totalorder %s23, 7
      %p55 = por %p53, %p54
      %p56 = scmp.ne.s32.totalorder %s45, %s46
      %p57 = scmp.eq.s32.totalorder %s23, 0
      %p58 = por %p56, %p57
      %p59 = scmp.ne.s32.totalorder %s45, %s46
      %p60 = scmp.eq.s32.totalorder %s24, 7
      %p61 = por %p59, %p60
      %p63 = scmp.ne.s32.totalorder %s46, %s62
      %p64 = scmp.eq.s32.totalorder %s24, 0
      %p65 = por %p63, %p64
      %s66 = ssub.s32 %s25, %s37
      %s67 = ssub.s32 %s26, %s33
      %s68 = sor.u32 %s66, %s67
      %p69 = scmp.eq.s32.totalorder %s68, 0
      %s71 = sadd.s32 %s70, 1
      %s72 = scalar_select %p69, %s70, %s71
      %p75 = pneg %p69
      %p76 = scmp.eq.s32.totalorder %s18, 7
      %p77 = por %p75, %p76
      %p78 = scmp.ne.s32.totalorder %s70, %s73
      %p79 = scmp.eq.s32.totalorder %s18, 0
      %p80 = por %p78, %p79
      %p81 = scmp.ne.s32.totalorder %s70, %s73
      %p82 = scmp.eq.s32.totalorder %s23, 7
      %p83 = por %p81, %p82
      %p84 = scmp.ne.s32.totalorder %s73, %s74
      %p85 = scmp.eq.s32.totalorder %s23, 0
      %p86 = por %p84, %p85
      %p87 = scmp.ne.s32.totalorder %s73, %s74
      %p88 = scmp.eq.s32.totalorder %s24, 7
      %p89 = por %p87, %p88
      %p91 = scmp.ne.s32.totalorder %s74, %s90
      %p92 = scmp.eq.s32.totalorder %s24, 0
      %p93 = por %p91, %p92
      %s94 = ssub.s32 %s25, %s37
      %s95 = ssub.s32 %s26, %s33
      %s96 = sor.u32 %s94, %s95
      %p97 = scmp.eq.s32.totalorder %s96, 0
      %s99 = sadd.s32 %s98, 1
      %s100 = scalar_select %p97, %s98, %s99
      %p103 = pneg %p97
      %p104 = scmp.eq.s32.totalorder %s18, 7
      %p105 = por %p103, %p104
      %p106 = scmp.ne.s32.totalorder %s98, %s101
      %p107 = scmp.eq.s32.totalorder %s18, 0
      %p108 = por %p106, %p107
      %p109 = scmp.ne.s32.totalorder %s98, %s101
      %p110 = scmp.eq.s32.totalorder %s23, 7
      %p111 = por %p109, %p110
      %p112 = scmp.ne.s32.totalorder %s101, %s102
      %p113 = scmp.eq.s32.totalorder %s23, 0
      %p114 = por %p112, %p113
      %p115 = scmp.ne.s32.totalorder %s101, %s102
      %p116 = scmp.eq.s32.totalorder %s24, 7
      %p117 = por %p115, %p116
      %p119 = scmp.ne.s32.totalorder %s102, %s118
      %p120 = scmp.eq.s32.totalorder %s24, 0
      %p121 = por %p119, %p120
      %s122 = ssub.s32 %s25, %s37
      %s123 = ssub.s32 %s26, %s33
      %s124 = sor.u32 %s122, %s123
      %p125 = scmp.eq.s32.totalorder %s124, 0
      %s127 = sadd.s32 %s126, 1
      %s128 = scalar_select %p125, %s126, %s127
      %p131 = pneg %p125
      %p132 = scmp.eq.s32.totalorder %s18, 7
      %p133 = por %p131, %p132
      %p134 = scmp.ne.s32.totalorder %s126, %s129
      %p135 = scmp.eq.s32.totalorder %s18, 0
      %p136 = por %p134, %p135
      %p137 = scmp.ne.s32.totalorder %s126, %s129
      %p138 = scmp.eq.s32.totalorder %s23, 7
      %p139 = por %p137, %p138
      %p140 = scmp.ne.s32.totalorder %s129, %s130
      %p141 = scmp.eq.s32.totalorder %s23, 0
      %p142 = por %p140, %p141
      %p143 = scmp.ne.s32.totalorder %s129, %s130
      %p144 = scmp.eq.s32.totalorder %s24, 7
      %p145 = por %p143, %p144
      %p147 = scmp.ne.s32.totalorder %s130, %s146
      %p148 = scmp.eq.s32.totalorder %s24, 0
      %p149 = por %p147, %p148
      %p150 = scmp.le.s32.totalorder 1, %s18
      %p151 = scmp.lt.s32.totalorder %s18, 9
      %p152 = pnand %p150, %p151
      %p153 = pneg %p152
      // Predicated region
      $region9: #{tpu_custom_call.1} parent=5 // pred_check
        _
      $region10: #{tpu_custom_call.1} parent=5 // pred_check_branch
        %155 = sbr.rel (%p152) target = $region12
      $region11: #{tpu_custom_call.1} parent=5 // pred_region
        %s156 = ssub.s32 %s18, 1
      $region12: #{tpu_custom_call.1} parent=5 // pred_fallthru
        _
      %p157 = scmp.lt.s32.totalorder %s18, 8
      // Predicated region
      $region13: #{tpu_custom_call.1} parent=5 // pred_check
        %p158 = pneg %p157
      $region14: #{tpu_custom_call.1} parent=5 // pred_check_branch
        %160 = sbr.rel (%p158) target = $region16
      $region15: #{tpu_custom_call.1} parent=5 // pred_region
        // Predicated region
        $region17: #{tpu_custom_call.1} parent=15 // pred_check
          %p161 = pneg %p52
        $region18: #{tpu_custom_call.1} parent=15 // pred_check_branch
          %163 = sbr.rel (%p161) target = $region20
        $region19: #{tpu_custom_call.1} parent=15 // pred_region
          %s164 = sand.u32 %s42, 1
          %s165 = scalar_lea.sflag [#allocation3], %s164
          %s166 = sand.u32 %s42, 1
          %s167 = smul.addr %s166, 12
          %s168 = scalar_lea.vmem [#allocation2], %s167
          %170 = vsyncadd %s165, 0
          %s171 = smul.addr %s25, 12
          %s172 = sadd.s32 %s26, %s171
          %s173 = scalar_lea.hbm %s0, %s172
          %s174 = sshll.u32 %s173, 4
          %s175 = int_to_ptr.hbm [resolvable:$true] %s174
          %s176 = sshll.u32 %s168, 4
          %s177 = int_to_ptr.vmem [resolvable:$true] %s176
          %182 = dma.hbm_to_vmem [thread:$0]  %s175, 192, %s177, %s165, 16, 16, 1
        $region20: #{tpu_custom_call.1} parent=15 // pred_fallthru
          _
        // Predicated region
        $region21: #{tpu_custom_call.1} parent=15 // pred_check
          %p183 = pneg %p80
        $region22: #{tpu_custom_call.1} parent=15 // pred_check_branch
          %185 = sbr.rel (%p183) target = $region24
        $region23: #{tpu_custom_call.1} parent=15 // pred_region
          %s186 = sand.u32 %s18, 1
          %s187 = scalar_lea.sflag [#allocation6], %s186
          %s188 = sand.u32 %s70, 1
          %s189 = smul.addr %s188, 4
          %s190 = scalar_lea.vmem [#allocation5], %s189
          %192 = vsyncadd %s187, 0
          %s193 = smul.addr %s25, 2
          %s194 = sadd.s32 %s26, %s193
          %s195 = smul.addr %s194, 2
          %s196 = scalar_lea.hbm %s1, %s195
          %s197 = sshll.u32 %s196, 4
          %s198 = int_to_ptr.hbm [resolvable:$true] %s197
          %s199 = sshll.u32 %s190, 4
          %s200 = int_to_ptr.vmem [resolvable:$true] %s199
          %205 = dma.hbm_to_vmem [thread:$0]  %s198, 64, %s200, %s187, 32, 32, 2
        $region24: #{tpu_custom_call.1} parent=15 // pred_fallthru
          _
        // Predicated region
        $region25: #{tpu_custom_call.1} parent=15 // pred_check
          %p206 = pneg %p108
        $region26: #{tpu_custom_call.1} parent=15 // pred_check_branch
          %208 = sbr.rel (%p206) target = $region28
        $region27: #{tpu_custom_call.1} parent=15 // pred_region
          %s209 = sand.u32 %s18, 1
          %s210 = scalar_lea.sflag [#allocation6], %s209
          %s211 = sand.u32 %s98, 1
          %s212 = smul.addr %s211, 2
          %s213 = scalar_lea.vmem [#allocation7], %s212
          %215 = vsyncadd %s210, 0
          %s216 = smul.addr %s25, 2
          %s217 = sadd.s32 %s26, %s216
          %s218 = scalar_lea.hbm %s2, %s217
          %s219 = sshll.u32 %s218, 4
          %s220 = int_to_ptr.hbm [resolvable:$true] %s219
          %s221 = sshll.u32 %s213, 4
          %s222 = int_to_ptr.vmem [resolvable:$true] %s221
          %227 = dma.hbm_to_vmem [thread:$0]  %s220, 32, %s222, %s210, 16, 16, 1
        $region28: #{tpu_custom_call.1} parent=15 // pred_fallthru
          _
      $region16: #{tpu_custom_call.1} parent=5 // pred_fallthru
        _
      %p228 = scmp.le.s32.totalorder 1, %s18
      %p229 = scmp.lt.s32.totalorder %s18, 9
      %p230 = pnand %p228, %p229
      %p231 = pneg %p230
      // Predicated region
      $region29: #{tpu_custom_call.1} parent=5 // pred_check
        _
      $region30: #{tpu_custom_call.1} parent=5 // pred_check_branch
        %233 = sbr.rel (%p230) target = $region32
      $region31: #{tpu_custom_call.1} parent=5 // pred_region
        %s234 = ssub.s32 %s18, 1
        %s235 = sand.u32 %s45, 1
        %s236 = scalar_lea.sflag [#allocation3], %s235
        %s237 = sand.u32 %s45, 1
        %s238 = smul.addr %s237, 12
        %s239 = scalar_lea.vmem [#allocation2], %s238
        // Predicated region
        $region33: #{tpu_custom_call.1} parent=31 // pred_check
          %p240 = pneg %p58
        $region34: #{tpu_custom_call.1} parent=31 // pred_check_branch
          %242 = sbr.rel (%p240) target = $region36
        $region35: #{tpu_custom_call.1} parent=31 // pred_region
          %244 = dma.done %s236, 192
        $region36: #{tpu_custom_call.1} parent=31 // pred_fallthru
          _
        %s245 = sand.u32 %s23, 1
        %s246 = scalar_lea.sflag [#allocation6], %s245
        %s247 = sand.u32 %s73, 1
        %s248 = smul.addr %s247, 4
        %s249 = scalar_lea.vmem [#allocation5], %s248
        // Predicated region
        $region37: #{tpu_custom_call.1} parent=31 // pred_check
          %p250 = pneg %p86
        $region38: #{tpu_custom_call.1} parent=31 // pred_check_branch
          %252 = sbr.rel (%p250) target = $region40
        $region39: #{tpu_custom_call.1} parent=31 // pred_region
          %254 = dma.done %s246, 64
        $region40: #{tpu_custom_call.1} parent=31 // pred_fallthru
          _
        %s255 = sand.u32 %s23, 1
        %s256 = scalar_lea.sflag [#allocation6], %s255
        %s257 = sand.u32 %s101, 1
        %s258 = smul.addr %s257, 2
        %s259 = scalar_lea.vmem [#allocation7], %s258
        // Predicated region
        $region41: #{tpu_custom_call.1} parent=31 // pred_check
          %p260 = pneg %p114
        $region42: #{tpu_custom_call.1} parent=31 // pred_check_branch
          %262 = sbr.rel (%p260) target = $region44
        $region43: #{tpu_custom_call.1} parent=31 // pred_region
          %264 = dma.done %s256, 32
        $region44: #{tpu_custom_call.1} parent=31 // pred_fallthru
          _
        %s265 = sand.u32 %s45, 1
        %s266 = scalar_lea.sflag [#allocation3], %s265
        %s267 = sand.u32 %s45, 1
        %s268 = smul.addr %s267, 12
        %s269 = scalar_lea.vmem [#allocation2], %s268
        %p270 = pneg %p58
        %p271 = pneg %p55
        %s272 = sand.u32 %s23, 1
        %s273 = scalar_lea.sflag [#allocation6], %s272
        %s274 = sand.u32 %s73, 1
        %s275 = smul.addr %s274, 4
        %s276 = scalar_lea.vmem [#allocation5], %s275
        %p277 = pneg %p86
        %p278 = pneg %p83
        %s279 = sand.u32 %s23, 1
        %s280 = scalar_lea.sflag [#allocation6], %s279
        %s281 = sand.u32 %s101, 1
        %s282 = smul.addr %s281, 2
        %s283 = scalar_lea.vmem [#allocation7], %s282
        %p284 = pneg %p114
        %p285 = pneg %p111
        %p286 = pneg %p142
        %p287 = pneg %p139
        %s288 = sand.u32 %s129, 1
        %s289 = scalar_lea.sflag [#allocation4], %s288
        %s290 = sand.u32 %s129, 1
        %s291 = scalar_lea.vmem [#allocation8], %s290
        %v292 = vld [vmem:[%s249] sm:$0x3]
        %v293 = vld [vmem:[%s249 + $0x2] sm:$0x3]
        %v294 = vld [vmem:[%s259] sm:$0x1]
        %v295 = vld [vmem:[%s259 + $0x1] sm:$0x1]
        %v296 = vunpack.c.l.bf16 %v294
        %v297 = vunpack.c.l.bf16 %v295
        %v298 = vld [vmem:[%s239] sm:$0x1]
        %v299 = vld [vmem:[%s239 + $0x6] sm:$0x1]
        %v300 = vunpack.c.l.bf16 %v298
        %v301 = vunpack.c.l.bf16 %v299
        %s302 = scalar_lea.vmem %s239, 1 [#allocation2]
        %v303 = vld [vmem:[%s302] sm:$0x1]
        %v304 = vld [vmem:[%s302 + $0x6] sm:$0x1]
        %v305 = vunpack.c.l.bf16 %v303
        %v306 = vunpack.c.l.bf16 %v304
        %v307 = vmax.f32 %v300, %v305
        %v308 = vmax.f32 %v301, %v306
        %s309 = scalar_lea.vmem %s239, 2 [#allocation2]
        %v310 = vld [vmem:[%s309] sm:$0x1]
        %v311 = vld [vmem:[%s309 + $0x6] sm:$0x1]
        %v312 = vunpack.c.l.bf16 %v310
        %v313 = vunpack.c.l.bf16 %v311
        %v314 = vmax.f32 %v307, %v312
        %v315 = vmax.f32 %v308, %v313
        %s316 = scalar_lea.vmem %s239, 3 [#allocation2]
        %v317 = vld [vmem:[%s316] sm:$0x1]
        %v318 = vld [vmem:[%s316 + $0x6] sm:$0x1]
        %v319 = vunpack.c.l.bf16 %v317
        %v320 = vunpack.c.l.bf16 %v318
        %v321 = vmax.f32 %v314, %v319
        %v322 = vmax.f32 %v315, %v320
        %s323 = scalar_lea.vmem %s239, 4 [#allocation2]
        %v324 = vld [vmem:[%s323] sm:$0x1]
        %v325 = vld [vmem:[%s323 + $0x6] sm:$0x1]
        %v326 = vunpack.c.l.bf16 %v324
        %v327 = vunpack.c.l.bf16 %v325
        %v328 = vmax.f32 %v321, %v326
        %v329 = vmax.f32 %v322, %v327
        %s330 = scalar_lea.vmem %s239, 5 [#allocation2]
        %v331 = vld [vmem:[%s330] sm:$0x1]
        %v332 = vld [vmem:[%s330 + $0x6] sm:$0x1]
        %v333 = vunpack.c.l.bf16 %v331
        %v334 = vunpack.c.l.bf16 %v332
        %v335 = vmax.f32 %v328, %v333
        %v336 = vmax.f32 %v329, %v334
        %v337 = vsub.f32 %v300, %v335
        %v338 = vsub.f32 %v301, %v336
        %v339 = vmul.f32 %v337, 1.442695
        %v340 = vpow.pop %v339
        %v341 = vmul.f32 %v338, 1.442695
        %v342 = vpow.pop %v341
        %v343 = vsub.f32 %v305, %v335
        %v344 = vsub.f32 %v306, %v336
        %v345 = vmul.f32 %v343, 1.442695
        %v346 = vpow.pop %v345
        %v347 = vmul.f32 %v344, 1.442695
        %v348 = vpow.pop %v347
        %v349 = vadd.f32 %v340, %v346
        %v350 = vadd.f32 %v342, %v348
        %vm351 = vcmp.ge.f32.partialorder %v292, 0.3282531
        %vm352 = vcmp.ge.f32.partialorder %v293, 0.3282531
        %v353 = vsel %vm351, %v305, %v300
        %v354 = vsel %vm352, %v306, %v301
        %v355 = vsub.f32 %v312, %v335
        %v356 = vsub.f32 %v313, %v336
        %v357 = vmul.f32 %v355, 1.442695
        %v358 = vpow.pop %v357
        %v359 = vmul.f32 %v356, 1.442695
        %v360 = vpow.pop %v359
        %v361 = vadd.f32 %v349, %v358
        %v362 = vadd.f32 %v350, %v360
        %vm363 = vcmp.ge.f32.partialorder %v292, 0.46242648
        %vm364 = vcmp.ge.f32.partialorder %v293, 0.46242648
        %v365 = vsel %vm363, %v312, %v353
        %v366 = vsel %vm364, %v313, %v354
        %v367 = vsel %vm363, 2.0, 1.0
        %v368 = vsel %vm364, 2.0, 1.0
        %v369 = vsub.f32 %v319, %v335
        %v370 = vsub.f32 %v320, %v336
        %v371 = vmul.f32 %v369, 1.442695
        %v372 = vpow.pop %v371
        %v373 = vmul.f32 %v370, 1.442695
        %v374 = vpow.pop %v373
        %v375 = vadd.f32 %v361, %v372
        %v376 = vadd.f32 %v362, %v374
        %vm377 = vcmp.ge.f32.partialorder %v292, 0.55111027
        %vm378 = vcmp.ge.f32.partialorder %v293, 0.55111027
        %v379 = vsel %vm377, %v319, %v365
        %v380 = vsel %vm378, %v320, %v366
        %v381 = vsel %vm377, 5.0, %v367
        %v382 = vsel %vm378, 5.0, %v368
        %v383 = vsub.f32 %v326, %v335
        %v384 = vsub.f32 %v327, %v336
        %v385 = vmul.f32 %v383, 1.442695
        %v386 = vpow.pop %v385
        %v387 = vmul.f32 %v384, 1.442695
        %v388 = vpow.pop %v387
        %v389 = vadd.f32 %v375, %v386
        %v390 = vadd.f32 %v376, %v388
        %vm391 = vcmp.ge.f32.partialorder %v292, 0.6181969
        %vm392 = vcmp.ge.f32.partialorder %v293, 0.6181969
        %v393 = vsel %vm391, %v326, %v379
        %v394 = vsel %vm392, %v327, %v380
        %v395 = vsel %vm391, 10.0, %v381
        %v396 = vsel %vm392, 10.0, %v382
        %v397 = vsub.f32 %v333, %v335
        %v398 = vsub.f32 %v334, %v336
        %v399 = vmul.f32 %v397, 1.442695
        %v400 = vpow.pop %v399
        %v401 = vmul.f32 %v398, 1.442695
        %v402 = vpow.pop %v401
        %v403 = vadd.f32 %v389, %v400
        %v404 = vadd.f32 %v390, %v402
        %vm405 = vcmp.ge.f32.partialorder %v292, 0.7245268
        %vm406 = vcmp.ge.f32.partialorder %v293, 0.7245268
        %v407 = vsel %vm405, %v333, %v393
        %v408 = vsel %vm406, %v334, %v394
        %v409 = vsel %vm405, 30.0, %v395
        %v410 = vsel %vm406, 30.0, %v396
        %v411 = vlog2.pop %v403
        %v412 = vmul.f32 %v411, 0.6931472
        %v413 = vlog2.pop %v404
        %v414 = vmul.f32 %v413, 0.6931472
        %v415 = vadd.f32 %v335, %v412
        %v416 = vadd.f32 %v336, %v414
        %v417 = vsub.f32 %v415, %v407
        %v418 = vsub.f32 %v416, %v408
        %v419 = vmul.f32 %v417, %v409
        %v420 = vmul.f32 %v418, %v410
        %v421 = vmul.f32 %v419, %v296
        %v422 = vmul.f32 %v420, %v297
        %vm423 = vcmask 1041408
        %v424 = vsel %vm423, %v421, 0.0
        %v425 = vsel %vm423, %v422, 0.0
        %v426 = vadd.f32 %v424, %v425
        %v427 = vsel %vm423, %v426, 0.0
        %v428 = vrot.slane %v427, 4
        %v429 = vadd.f32 %v427, %v428
        %v430 = vrot.slane %v429, 2
        %v431 = vadd.f32 %v429, %v430
        %v432 = vrot.slane %v431, 1
        %v433 = vadd.f32 %v431, %v432
        %434 = vst [vmem:[%s291] sm:$0x1] %v433
        %s435 = sand.u32 %s129, 1
        %s436 = scalar_lea.sflag [#allocation4], %s435
        %s437 = sand.u32 %s129, 1
        %s438 = scalar_lea.vmem [#allocation8], %s437
        // Predicated region
        $region45: #{tpu_custom_call.1} parent=31 // pred_check
          %p439 = pneg %p139
        $region46: #{tpu_custom_call.1} parent=31 // pred_check_branch
          %441 = sbr.rel (%p439) target = $region48
        $region47: #{tpu_custom_call.1} parent=31 // pred_region
          %443 = vsyncadd %s436, 0
          %s444 = sadd.s32 %s28, %s27
          %s445 = scalar_lea.hbm %s3, %s444
          %s447 = sshll.u32 %s438, 4
          %s448 = int_to_ptr.vmem [resolvable:$true] %s447
          %s449 = sshll.u32 %s445, 4
          %s450 = int_to_ptr.hbm [resolvable:$true] %s449
          %452 = dma.vmem_to_hbm [thread:$0]  %s448, 16, %s450, %s436
        $region48: #{tpu_custom_call.1} parent=31 // pred_fallthru
          _
      $region32: #{tpu_custom_call.1} parent=5 // pred_fallthru
        _
      %p453 = scmp.le.s32.totalorder 2, %s18
      // Predicated region
      $region49: #{tpu_custom_call.1} parent=5 // pred_check
        %p454 = pneg %p453
      $region50: #{tpu_custom_call.1} parent=5 // pred_check_branch
        %456 = sbr.rel (%p454) target = $region52
      $region51: #{tpu_custom_call.1} parent=5 // pred_region
        %s457 = ssub.s32 %s18, 2
        // Predicated region
        $region53: #{tpu_custom_call.1} parent=51 // pred_check
          %p458 = pneg %p145
        $region54: #{tpu_custom_call.1} parent=51 // pred_check_branch
          %460 = sbr.rel (%p458) target = $region56
        $region55: #{tpu_custom_call.1} parent=51 // pred_region
          %s461 = sand.u32 %s130, 1
          %s462 = scalar_lea.sflag [#allocation4], %s461
          %s463 = sand.u32 %s130, 1
          %s464 = scalar_lea.vmem [#allocation8], %s463
          %466 = dma.done %s462, 16
        $region56: #{tpu_custom_call.1} parent=51 // pred_fallthru
          _
      $region52: #{tpu_custom_call.1} parent=5 // pred_fallthru
        _
    $region6: #{tpu_custom_call.1} parent=1 // loop_footer
      %s22 = sadd.s32 1, %s18
    $region7: #{tpu_custom_call.1} parent=1 // loop_footer_branch
      %17 = sbr.rel target = $region3
    $region8: #{tpu_custom_call.1} parent=1 // loop_exit
      _
    %467 = vsyncpa [#allocation3], 1
    %s468 = scalar_lea.sflag [#allocation3], 1
    %469 = vsyncpa %s468, 1
    %470 = vsyncpa [#allocation6], 1
    %s471 = scalar_lea.sflag [#allocation6], 1
    %472 = vsyncpa %s471, 1
    %473 = vsyncpa [#allocation4], 1
    %s474 = scalar_lea.sflag [#allocation4], 1
    %475 = vsyncpa %s474, 1

</llo_original>
